<compile_context>
chip_gen: v7x
topology: tpu7x:2x2x1
jax: 0.10.0
libtpu: 0.0.40
codegen_flags: <defaults>
</compile_context>

<pallas_src>
import jax
import jax.numpy as jnp
from jax.experimental import pallas as pl
from jax.experimental.pallas import tpu as pltpu

N_IN = 2
HIDDEN = 128


def _round_up(x, m):
    return ((x + m - 1) // m) * m


def _silu(x):
    # Exact identity: x * sigmoid(x) == 0.5 * x * (1 + tanh(x / 2)).  One EUP op per element.
    return 0.5 * x * (1.0 + jnp.tanh(0.5 * x))


def toy_mlp_kernel(x_ref, w1_ref, w23_ref, w4_ref, b_ref, o_ref):
    # x_ref:   (2, TB)         f32   input, batch in lanes
    # w1_ref:  (128, 2)        f32   lin1 weight (out, in)  -- used on the VPU
    # w23_ref: (256, 128)      bf16  [lin2 ; lin3] weights (out, in), resident
    # w4_ref:  (OUT_PAD, 128)  bf16  lin4 weight zero-padded to OUT_PAD rows
    # b_ref:   (128, 4)        f32   columns: b1, b2, b3, b4 (zero-padded)
    # o_ref:   (OUT_PAD, TB)   f32   lane-dense output tile
    x = x_ref[...]                           # (2, TB) f32
    w1 = w1_ref[...]                         # (128, 2) f32
    b = b_ref[...]                           # (128, 4) f32

    # Layer 1 (K=2): two VPU broadcast multiply-adds, no sliver MXU matmul.
    h = w1[:, 0:1] * x[0:1, :] + w1[:, 1:2] * x[1:2, :] + b[:, 0:1]
    h = _silu(h)                             # (128, TB) f32

    # Layer 2: bf16 x bf16 MXU, f32 accumulate.
    h = jnp.dot(w23_ref[0:HIDDEN, :], h.astype(jnp.bfloat16),
                preferred_element_type=jnp.float32) + b[:, 1:2]
    h = _silu(h)

    # Layer 3
    h = jnp.dot(w23_ref[HIDDEN:2 * HIDDEN, :], h.astype(jnp.bfloat16),
                preferred_element_type=jnp.float32) + b[:, 2:3]
    h = _silu(h)

    # Layer 4: narrow (OUT_PAD-row) output, unmasked lane-dense store over the batch.
    npad = o_ref.shape[0]
    out = jnp.dot(w4_ref[...], h.astype(jnp.bfloat16),
                  preferred_element_type=jnp.float32) + b[0:npad, 3:4]
    o_ref[...] = out


def toy_model_forward(x, params, n_output, *, block_rows=2048):
    """x: (B, 2) float32. params: packed weights (see init_params). Returns (B, n_output)."""
    B = x.shape[0]
    w1, w23, w4, b = params["w1"], params["w23"], params["w4"], params["b"]
    n_out_pad = w4.shape[0]

    # Batch lives in the lane dim -> tile must be a multiple of 128 lanes.
    b128 = _round_up(B, 128)
    tb = min(block_rows, b128)
    if b128 >= 256:
        # Keep >= 2 grid steps so v7x can shard the "parallel" batch axis over its 2 TCs.
        tb = min(tb, _round_up(b128 // 2, 128))
    tb = max(128, (tb // 128) * 128)
    b_pad = _round_up(B, tb)
    grid = (b_pad // tb,)

    # Present x as (2, B_pad): lane-dense load, cheap layer-1 broadcasts in-kernel.
    xt = jnp.transpose(x)
    if b_pad != B:
        xt = jnp.pad(xt, ((0, 0), (0, b_pad - B)))

    cost = pl.CostEstimate(
        flops=2 * b_pad * (N_IN * HIDDEN + 2 * HIDDEN * HIDDEN + HIDDEN * n_out_pad),
        transcendentals=3 * b_pad * HIDDEN,
        bytes_accessed=(w1.size * 4 + w23.size * 2 + w4.size * 2 + b.size * 4
                        + b_pad * N_IN * 4 + b_pad * n_out_pad * 4),
    )

    out = pl.pallas_call(
        toy_mlp_kernel,
        out_shape=jax.ShapeDtypeStruct((n_out_pad, b_pad), jnp.float32),
        grid=grid,
        in_specs=[
            pl.BlockSpec((N_IN, tb), lambda i: (0, i)),                # x^T: tiled over batch lanes
            pl.BlockSpec((HIDDEN, N_IN), lambda i: (0, 0)),            # w1: resident
            pl.BlockSpec((2 * HIDDEN, HIDDEN), lambda i: (0, 0)),      # [w2;w3]: resident
            pl.BlockSpec((n_out_pad, HIDDEN), lambda i: (0, 0)),       # w4 (padded rows): resident
            pl.BlockSpec((HIDDEN, 4), lambda i: (0, 0)),               # packed biases: resident
        ],
        out_specs=pl.BlockSpec((n_out_pad, tb), lambda i: (0, i)),
        compiler_params=pltpu.CompilerParams(
            dimension_semantics=("parallel",),
            vmem_limit_bytes=48 * 1024 * 1024,
        ),
        cost_estimate=cost,
    )(xt, w1, w23, w4, b)

    # Tiny (n_output, B) slice + transpose -- the heavy (B, 128) writeback/slice is gone.
    return jnp.transpose(out[:n_output, :B])


def init_params(key, n_output=2, hidden=HIDDEN, n_in=N_IN):
    """Deterministic init mimicking nn.Linear (uniform +/- 1/sqrt(fan_in)).

    Weights are stored in PyTorch (out_features, in_features) layout:
      w1  (128, 2)       f32   (VPU path)
      w23 (256, 128)     bf16  (lin2 stacked over lin3, MXU path)
      w4  (OUT_PAD, 128) bf16  (output rows zero-padded to a multiple of 8)
      b   (128, 4)       f32   (columns: b1, b2, b3, b4-padded)
    """
    dims = [(n_in, hidden), (hidden, hidden), (hidden, hidden), (hidden, n_output)]
    ws, bs = [], []
    for fan_in, fan_out in dims:
        key, kw, kb = jax.random.split(key, 3)
        bound = 1.0 / (fan_in ** 0.5)
        ws.append(jax.random.uniform(kw, (fan_out, fan_in), jnp.float32,
                                     minval=-bound, maxval=bound))
        bs.append(jax.random.uniform(kb, (fan_out,), jnp.float32,
                                     minval=-bound, maxval=bound))

    n_out_pad = max(8, _round_up(n_output, 8))
    w4_pad = jnp.zeros((n_out_pad, hidden), jnp.float32).at[:n_output].set(ws[3])
    b4_pad = jnp.zeros((hidden,), jnp.float32).at[:n_output].set(bs[3])

    params = {
        "w1": ws[0],                                                        # (128, 2)  f32
        "w23": jnp.concatenate([ws[1], ws[2]], axis=0).astype(jnp.bfloat16),  # (256, 128) bf16
        "w4": w4_pad.astype(jnp.bfloat16),                                  # (OUT_PAD, 128) bf16
        "b": jnp.stack([bs[0], bs[1], bs[2], b4_pad], axis=1),              # (128, 4) f32
    }
    return params


def reference_forward(x, params, n_output):
    """Pure-JAX reference mirroring the kernel numerics (bf16 weights + bf16 dot inputs, f32 acc)."""
    b = params["b"]                                   # (128, 4) f32
    w1 = params["w1"]                                 # (128, 2) f32
    h = _silu(x @ w1.T + b[:, 0])                     # (B, 128) f32
    w2 = params["w23"][:HIDDEN]                       # (128, 128) bf16
    h = _silu(jnp.dot(h.astype(jnp.bfloat16), w2.T,
                      preferred_element_type=jnp.float32) + b[:, 1])
    w3 = params["w23"][HIDDEN:]
    h = _silu(jnp.dot(h.astype(jnp.bfloat16), w3.T,
                      preferred_element_type=jnp.float32) + b[:, 2])
    w4 = params["w4"]                                 # (OUT_PAD, 128) bf16
    out = jnp.dot(h.astype(jnp.bfloat16), w4.T,
                  preferred_element_type=jnp.float32) + b[:w4.shape[0], 3]
    return out[:, :n_output]


if __name__ == "__main__":
    key = jax.random.PRNGKey(0)
    key, kx = jax.random.split(key)

    # Small shapes: non-multiple of 128 batch exercises padding + a 2-step grid.
    B, n_output = 200, 2
    x = jax.random.normal(kx, (B, N_IN), jnp.float32)
    params = init_params(key, n_output=n_output)

    out = toy_model_forward(x, params, n_output)
    out = jax.block_until_ready(out)

    ref = reference_forward(x, params, n_output)
    assert out.shape == (B, n_output), out.shape
    assert jnp.allclose(out, ref, atol=2e-3, rtol=2e-3), "mismatch vs reference"

    print("KERNEL_OK")
</pallas_src>

<mosaic_0001>
module attributes {stable_mosaic.version = 11 : i64} {
  func.func @toy_mlp_kernel(%arg0: i32, %arg1: memref<2x128xf32, #tpu.memory_space<vmem>>, %arg2: memref<128x2xf32, #tpu.memory_space<vmem>>, %arg3: memref<256x128xbf16, #tpu.memory_space<vmem>>, %arg4: memref<8x128xbf16, #tpu.memory_space<vmem>>, %arg5: memref<128x4xf32, #tpu.memory_space<vmem>>, %arg6: memref<8x128xf32, #tpu.memory_space<vmem>>) attributes {dimension_semantics = [#tpu.dimension_semantics<parallel>], iteration_bounds = array<i64: 2>, scalar_prefetch = 0 : i64, scratch_operands = 0 : i64, tpu.core_type = #tpu.core_type<tc>, window_params = [{transform_indices = @transform_0, window_bounds = array<i64: 2, 128>}, {pipeline_mode = #tpu.pipeline_mode<synchronous>, transform_indices = @transform_1, window_bounds = array<i64: 128, 2>}, {pipeline_mode = #tpu.pipeline_mode<synchronous>, transform_indices = @transform_2, window_bounds = array<i64: 256, 128>}, {pipeline_mode = #tpu.pipeline_mode<synchronous>, transform_indices = @transform_3, window_bounds = array<i64: 8, 128>}, {pipeline_mode = #tpu.pipeline_mode<synchronous>, transform_indices = @transform_4, window_bounds = array<i64: 128, 4>}, {transform_indices = @transform_5, window_bounds = array<i64: 8, 128>}]} {
    %c0 = arith.constant 0 : index
    %c0_0 = arith.constant 0 : index
    %0 = vector.load %arg1[%c0, %c0_0] : memref<2x128xf32, #tpu.memory_space<vmem>>, vector<2x128xf32>
    %c0_1 = arith.constant 0 : index
    %c0_2 = arith.constant 0 : index
    %1 = vector.load %arg2[%c0_1, %c0_2] : memref<128x2xf32, #tpu.memory_space<vmem>>, vector<128x2xf32>
    %c0_3 = arith.constant 0 : index
    %c0_4 = arith.constant 0 : index
    %2 = vector.load %arg5[%c0_3, %c0_4] : memref<128x4xf32, #tpu.memory_space<vmem>>, vector<128x4xf32>
    %3 = vector.extract_strided_slice %1 {offsets = [0, 0], sizes = [128, 1], strides = [1, 1]} : vector<128x2xf32> to vector<128x1xf32>
    %4 = vector.extract_strided_slice %0 {offsets = [0, 0], sizes = [1, 128], strides = [1, 1]} : vector<2x128xf32> to vector<1x128xf32>
    %5 = vector.broadcast %3 : vector<128x1xf32> to vector<128x128xf32>
    %6 = vector.broadcast %4 : vector<1x128xf32> to vector<128x128xf32>
    %7 = arith.mulf %5, %6 : vector<128x128xf32>
    %8 = vector.extract_strided_slice %1 {offsets = [0, 1], sizes = [128, 1], strides = [1, 1]} : vector<128x2xf32> to vector<128x1xf32>
    %9 = vector.extract_strided_slice %0 {offsets = [1, 0], sizes = [1, 128], strides = [1, 1]} : vector<2x128xf32> to vector<1x128xf32>
    %10 = vector.broadcast %8 : vector<128x1xf32> to vector<128x128xf32>
    %11 = vector.broadcast %9 : vector<1x128xf32> to vector<128x128xf32>
    %12 = arith.mulf %10, %11 : vector<128x128xf32>
    %13 = arith.addf %7, %12 : vector<128x128xf32>
    %14 = vector.extract_strided_slice %2 {offsets = [0, 0], sizes = [128, 1], strides = [1, 1]} : vector<128x4xf32> to vector<128x1xf32>
    %15 = vector.broadcast %14 : vector<128x1xf32> to vector<128x128xf32>
    %16 = arith.addf %13, %15 : vector<128x128xf32>
    %cst = arith.constant 5.000000e-01 : f32
    %17 = vector.broadcast %cst : f32 to vector<128x128xf32>
    %18 = arith.mulf %17, %16 : vector<128x128xf32>
    %cst_5 = arith.constant 5.000000e-01 : f32
    %19 = vector.broadcast %cst_5 : f32 to vector<128x128xf32>
    %20 = arith.mulf %19, %16 : vector<128x128xf32>
    %21 = math.tanh %20 : vector<128x128xf32>
    %cst_6 = arith.constant 1.000000e+00 : f32
    %22 = vector.broadcast %cst_6 : f32 to vector<128x128xf32>
    %23 = arith.addf %22, %21 : vector<128x128xf32>
    %24 = arith.mulf %18, %23 : vector<128x128xf32>
    %c0_7 = arith.constant 0 : index
    %c0_8 = arith.constant 0 : index
    %25 = vector.load %arg3[%c0_7, %c0_8] : memref<256x128xbf16, #tpu.memory_space<vmem>>, vector<128x128xbf16>
    %26 = arith.truncf %24 : vector<128x128xf32> to vector<128x128xbf16>
    %cst_9 = arith.constant dense<0.000000e+00> : vector<128x128xf32>
    %27 = tpu.matmul %25, %26, %cst_9 {dimension_numbers = #tpu.dot_dimension_numbers<[1], [0], [0], [1], [0, 0, 1, 1], [], []>} : vector<128x128xbf16>, vector<128x128xbf16>, vector<128x128xf32> -> vector<128x128xf32>
    %28 = vector.extract_strided_slice %2 {offsets = [0, 1], sizes = [128, 1], strides = [1, 1]} : vector<128x4xf32> to vector<128x1xf32>
    %29 = vector.broadcast %28 : vector<128x1xf32> to vector<128x128xf32>
    %30 = arith.addf %27, %29 : vector<128x128xf32>
    %cst_10 = arith.constant 5.000000e-01 : f32
    %31 = vector.broadcast %cst_10 : f32 to vector<128x128xf32>
    %32 = arith.mulf %31, %30 : vector<128x128xf32>
    %cst_11 = arith.constant 5.000000e-01 : f32
    %33 = vector.broadcast %cst_11 : f32 to vector<128x128xf32>
    %34 = arith.mulf %33, %30 : vector<128x128xf32>
    %35 = math.tanh %34 : vector<128x128xf32>
    %cst_12 = arith.constant 1.000000e+00 : f32
    %36 = vector.broadcast %cst_12 : f32 to vector<128x128xf32>
    %37 = arith.addf %36, %35 : vector<128x128xf32>
    %38 = arith.mulf %32, %37 : vector<128x128xf32>
    %c128 = arith.constant 128 : index
    %c0_13 = arith.constant 0 : index
    %39 = vector.load %arg3[%c128, %c0_13] : memref<256x128xbf16, #tpu.memory_space<vmem>>, vector<128x128xbf16>
    %40 = arith.truncf %38 : vector<128x128xf32> to vector<128x128xbf16>
    %cst_14 = arith.constant dense<0.000000e+00> : vector<128x128xf32>
    %41 = tpu.matmul %39, %40, %cst_14 {dimension_numbers = #tpu.dot_dimension_numbers<[1], [0], [0], [1], [0, 0, 1, 1], [], []>} : vector<128x128xbf16>, vector<128x128xbf16>, vector<128x128xf32> -> vector<128x128xf32>
    %42 = vector.extract_strided_slice %2 {offsets = [0, 2], sizes = [128, 1], strides = [1, 1]} : vector<128x4xf32> to vector<128x1xf32>
    %43 = vector.broadcast %42 : vector<128x1xf32> to vector<128x128xf32>
    %44 = arith.addf %41, %43 : vector<128x128xf32>
    %cst_15 = arith.constant 5.000000e-01 : f32
    %45 = vector.broadcast %cst_15 : f32 to vector<128x128xf32>
    %46 = arith.mulf %45, %44 : vector<128x128xf32>
    %cst_16 = arith.constant 5.000000e-01 : f32
    %47 = vector.broadcast %cst_16 : f32 to vector<128x128xf32>
    %48 = arith.mulf %47, %44 : vector<128x128xf32>
    %49 = math.tanh %48 : vector<128x128xf32>
    %cst_17 = arith.constant 1.000000e+00 : f32
    %50 = vector.broadcast %cst_17 : f32 to vector<128x128xf32>
    %51 = arith.addf %50, %49 : vector<128x128xf32>
    %52 = arith.mulf %46, %51 : vector<128x128xf32>
    %c0_18 = arith.constant 0 : index
    %c0_19 = arith.constant 0 : index
    %53 = vector.load %arg4[%c0_18, %c0_19] : memref<8x128xbf16, #tpu.memory_space<vmem>>, vector<8x128xbf16>
    %54 = arith.truncf %52 : vector<128x128xf32> to vector<128x128xbf16>
    %cst_20 = arith.constant dense<0.000000e+00> : vector<8x128xf32>
    %55 = tpu.matmul %53, %54, %cst_20 {dimension_numbers = #tpu.dot_dimension_numbers<[1], [0], [0], [1], [0, 0, 1, 1], [], []>} : vector<8x128xbf16>, vector<128x128xbf16>, vector<8x128xf32> -> vector<8x128xf32>
    %56 = vector.extract_strided_slice %2 {offsets = [0, 3], sizes = [8, 1], strides = [1, 1]} : vector<128x4xf32> to vector<8x1xf32>
    %57 = vector.broadcast %56 : vector<8x1xf32> to vector<8x128xf32>
    %58 = arith.addf %55, %57 : vector<8x128xf32>
    %c0_21 = arith.constant 0 : index
    %c0_22 = arith.constant 0 : index
    %59 = vector.load %arg6[%c0_21, %c0_22] : memref<8x128xf32, #tpu.memory_space<vmem>>, vector<8x128xf32>
    tpu.vector_store %arg6[%c0_21, %c0_22], %58 {strides = array<i32>} : memref<8x128xf32, #tpu.memory_space<vmem>>, vector<8x128xf32>,
    return
  }
  func.func @transform_0(%arg0: i32) -> (i32, i32) {
    %c0_i32 = arith.constant 0 : i32
    %c0_i32_0 = arith.constant 0 : i32
    return %c0_i32, %arg0 : i32, i32
  }
  func.func @transform_1(%arg0: i32) -> (i32, i32) {
    %c0_i32 = arith.constant 0 : i32
    %c0_i32_0 = arith.constant 0 : i32
    %c0_i32_1 = arith.constant 0 : i32
    return %c0_i32, %c0_i32_0 : i32, i32
  }
  func.func @transform_2(%arg0: i32) -> (i32, i32) {
    %c0_i32 = arith.constant 0 : i32
    %c0_i32_0 = arith.constant 0 : i32
    %c0_i32_1 = arith.constant 0 : i32
    return %c0_i32, %c0_i32_0 : i32, i32
  }
  func.func @transform_3(%arg0: i32) -> (i32, i32) {
    %c0_i32 = arith.constant 0 : i32
    %c0_i32_0 = arith.constant 0 : i32
    %c0_i32_1 = arith.constant 0 : i32
    return %c0_i32, %c0_i32_0 : i32, i32
  }
  func.func @transform_4(%arg0: i32) -> (i32, i32) {
    %c0_i32 = arith.constant 0 : i32
    %c0_i32_0 = arith.constant 0 : i32
    %c0_i32_1 = arith.constant 0 : i32
    return %c0_i32, %c0_i32_0 : i32, i32
  }
  func.func @transform_5(%arg0: i32) -> (i32, i32) {
    %c0_i32 = arith.constant 0 : i32
    %c0_i32_0 = arith.constant 0 : i32
    return %c0_i32, %arg0 : i32, i32
  }
}

</mosaic_0001>

<llo_original>
// kernel: tpu_custom_call.1
$region0: #{tpu_custom_call.1}
  #allocation0 [shape = 'u32[]', space=smem, size = 0x4, offset = 0x4, fixed_abs, tag = 'smem constant byte address 0x4 - core index']
  #allocation1 [shape = 'u32[144,128]{1,0:T(1,128)}', space=vmem, size = 0x12000, scoped, tag = 'internal scratch']
  %s0 = inlined_call_operand.vmem [shape: f32[2,256], index: 0, kind: input, shape index: {}]
  %s1 = inlined_call_operand.vmem [shape: f32[128,2], index: 1, kind: input, shape index: {}]
  %s2 = inlined_call_operand.vmem [shape: bf16[256,128], index: 2, kind: input, shape index: {}]
  %s3 = inlined_call_operand.vmem [shape: bf16[8,128], index: 3, kind: input, shape index: {}]
  %s4 = inlined_call_operand.vmem [shape: f32[128,4], index: 4, kind: input, shape index: {}]
  %s5 = inlined_call_operand.hbm [shape: f32[8,256], index: 5, kind: output, shape index: {}]
  %s6 = sld [smem:[#allocation0]]
  $region53: #{tpu_custom_call.1} parent=0
    _
  %s8 = ssub.s32 1, %s6
  %s9 = scalar_select 0, %s8, %s6
  $region1: #{tpu_custom_call.1} parent=0
    #allocation2 [shape = 'u8[8192]{0}', space=vmem, size = 0x2000, scoped, tag = 'output window, operand 0']
    #allocation3 [shape = 's32[2]{0}', space=sflag, size = 0x8, scoped, tag = 'scoped memory for tpu_custom_call.1']
    %10 = vsyncpa [#allocation3], 0
    %s11 = scalar_lea.sflag [#allocation3], 1
    %12 = vsyncpa %s11, 0
    loop: start=0, step=1, limit=4
    $region2: #{tpu_custom_call.1} parent=1 // loop_pre_header
      _
    $region3: #{tpu_custom_call.1} parent=1 // loop_header
      %s14 = sphi 0, %s18
      %p15 = scmp.ge.s32.totalorder %s14, 4
      %s24 = sphi 0, %s26
      %s27 = sphi 0, %s24
      %s28 = sphi 0, %s27
      %s44 = sphi 0, %s28
      %s48 = sphi 0, %s48
      %s50 = sphi 0, %s48
      %s51 = sphi 0, %s50
      %s65 = sphi 0, %s51
      %s69 = sphi 0, %s69
      %s71 = sphi 0, %s69
      %s72 = sphi 0, %s71
      %s86 = sphi 0, %s72
      %s90 = sphi 0, %s90
      %s92 = sphi 0, %s90
      %s93 = sphi 0, %s92
      %s107 = sphi 0, %s93
      %s111 = sphi 0, %s111
      %s113 = sphi 0, %s111
      %s114 = sphi 0, %s113
      %s128 = sphi 0, %s114
      %s134 = sphi 0, %s136
      %s137 = sphi 0, %s134
      %s138 = sphi 0, %s137
      %s154 = sphi 0, %s138
    $region4: #{tpu_custom_call.1} parent=1 // loop_header_branch
      %17 = sbr.rel (%p15) target = $region8
    $region5: #{tpu_custom_call.1} parent=1 // loop_body
      %s19 = ssub.s32 %s14, 1
      %s20 = ssub.s32 %s14, 2
      %s21 = sadd.s32 %s14, 1
      %s22 = ssub.s32 %s14, %s21
      %p23 = scmp.eq.s32.totalorder %s22, 0
      %s25 = sadd.s32 %s24, 1
      %s26 = scalar_select %p23, %s24, %s25
      %p29 = pneg %p23
      %p30 = scmp.eq.s32.totalorder %s14, 1
      %p31 = por %p29, %p30
      %p32 = scmp.ne.s32.totalorder %s24, %s27
      %p33 = scmp.eq.s32.totalorder %s14, 0
      %p34 = por %p32, %p33
      %p35 = scmp.ne.s32.totalorder %s24, %s27
      %p36 = scmp.eq.s32.totalorder %s19, 1
      %p37 = por %p35, %p36
      %p38 = scmp.ne.s32.totalorder %s27, %s28
      %p39 = scmp.eq.s32.totalorder %s19, 0
      %p40 = por %p38, %p39
      %p41 = scmp.ne.s32.totalorder %s27, %s28
      %p42 = scmp.eq.s32.totalorder %s20, 1
      %p43 = por %p41, %p42
      %p45 = scmp.ne.s32.totalorder %s28, %s44
      %p46 = scmp.eq.s32.totalorder %s20, 0
      %p47 = por %p45, %p46
      %s49 = sadd.s32 %s48, 1
      %p52 = scmp.eq.s32.totalorder %s14, 1
      %p53 = scmp.ne.s32.totalorder %s48, %s50
      %p54 = scmp.eq.s32.totalorder %s14, 0
      %p55 = por %p53, %p54
      %p56 = scmp.ne.s32.totalorder %s48, %s50
      %p57 = scmp.eq.s32.totalorder %s19, 1
      %p58 = por %p56, %p57
      %p59 = scmp.ne.s32.totalorder %s50, %s51
      %p60 = scmp.eq.s32.totalorder %s19, 0
      %p61 = por %p59, %p60
      %p62 = scmp.ne.s32.totalorder %s50, %s51
      %p63 = scmp.eq.s32.totalorder %s20, 1
      %p64 = por %p62, %p63
      %p66 = scmp.ne.s32.totalorder %s51, %s65
      %p67 = scmp.eq.s32.totalorder %s20, 0
      %p68 = por %p66, %p67
      %s70 = sadd.s32 %s69, 1
      %p73 = scmp.eq.s32.totalorder %s14, 1
      %p74 = scmp.ne.s32.totalorder %s69, %s71
      %p75 = scmp.eq.s32.totalorder %s14, 0
      %p76 = por %p74, %p75
      %p77 = scmp.ne.s32.totalorder %s69, %s71
      %p78 = scmp.eq.s32.totalorder %s19, 1
      %p79 = por %p77, %p78
      %p80 = scmp.ne.s32.totalorder %s71, %s72
      %p81 = scmp.eq.s32.totalorder %s19, 0
      %p82 = por %p80, %p81
      %p83 = scmp.ne.s32.totalorder %s71, %s72
      %p84 = scmp.eq.s32.totalorder %s20, 1
      %p85 = por %p83, %p84
      %p87 = scmp.ne.s32.totalorder %s72, %s86
      %p88 = scmp.eq.s32.totalorder %s20, 0
      %p89 = por %p87, %p88
      %s91 = sadd.s32 %s90, 1
      %p94 = scmp.eq.s32.totalorder %s14, 1
      %p95 = scmp.ne.s32.totalorder %s90, %s92
      %p96 = scmp.eq.s32.totalorder %s14, 0
      %p97 = por %p95, %p96
      %p98 = scmp.ne.s32.totalorder %s90, %s92
      %p99 = scmp.eq.s32.totalorder %s19, 1
      %p100 = por %p98, %p99
      %p101 = scmp.ne.s32.totalorder %s92, %s93
      %p102 = scmp.eq.s32.totalorder %s19, 0
      %p103 = por %p101, %p102
      %p104 = scmp.ne.s32.totalorder %s92, %s93
      %p105 = scmp.eq.s32.totalorder %s20, 1
      %p106 = por %p104, %p105
      %p108 = scmp.ne.s32.totalorder %s93, %s107
      %p109 = scmp.eq.s32.totalorder %s20, 0
      %p110 = por %p108, %p109
      %s112 = sadd.s32 %s111, 1
      %p115 = scmp.eq.s32.totalorder %s14, 1
      %p116 = scmp.ne.s32.totalorder %s111, %s113
      %p117 = scmp.eq.s32.totalorder %s14, 0
      %p118 = por %p116, %p117
      %p119 = scmp.ne.s32.totalorder %s111, %s113
      %p120 = scmp.eq.s32.totalorder %s19, 1
      %p121 = por %p119, %p120
      %p122 = scmp.ne.s32.totalorder %s113, %s114
      %p123 = scmp.eq.s32.totalorder %s19, 0
      %p124 = por %p122, %p123
      %p125 = scmp.ne.s32.totalorder %s113, %s114
      %p126 = scmp.eq.s32.totalorder %s20, 1
      %p127 = por %p125, %p126
      %p129 = scmp.ne.s32.totalorder %s114, %s128
      %p130 = scmp.eq.s32.totalorder %s20, 0
      %p131 = por %p129, %p130
      %s132 = ssub.s32 %s14, %s21
      %p133 = scmp.eq.s32.totalorder %s132, 0
      %s135 = sadd.s32 %s134, 1
      %s136 = scalar_select %p133, %s134, %s135
      %p139 = pneg %p133
      %p140 = scmp.eq.s32.totalorder %s14, 1
      %p141 = por %p139, %p140
      %p142 = scmp.ne.s32.totalorder %s134, %s137
      %p143 = scmp.eq.s32.totalorder %s14, 0
      %p144 = por %p142, %p143
      %p145 = scmp.ne.s32.totalorder %s134, %s137
      %p146 = scmp.eq.s32.totalorder %s19, 1
      %p147 = por %p145, %p146
      %p148 = scmp.ne.s32.totalorder %s137, %s138
      %p149 = scmp.eq.s32.totalorder %s19, 0
      %p150 = por %p148, %p149
      %p151 = scmp.ne.s32.totalorder %s137, %s138
      %p152 = scmp.eq.s32.totalorder %s20, 1
      %p153 = por %p151, %p152
      %p155 = scmp.ne.s32.totalorder %s138, %s154
      %p156 = scmp.eq.s32.totalorder %s20, 0
      %p157 = por %p155, %p156
      %p158 = scmp.le.s32.totalorder 1, %s14
      %p159 = scmp.lt.s32.totalorder %s14, 3
      %p160 = pnand %p158, %p159
      %p161 = pneg %p160
      // Predicated region
      $region9: #{tpu_custom_call.1} parent=5 // pred_check
        _
      $region10: #{tpu_custom_call.1} parent=5 // pred_check_branch
        %163 = sbr.rel (%p160) target = $region12
      $region11: #{tpu_custom_call.1} parent=5 // pred_region
        %s164 = ssub.s32 %s14, 1
        // Predicated region
        $region13: #{tpu_custom_call.1} parent=11 // pred_check
          %p165 = pneg %p61
        $region14: #{tpu_custom_call.1} parent=11 // pred_check_branch
          %167 = sbr.rel (%p165) target = $region16
        $region15: #{tpu_custom_call.1} parent=11 // pred_region
          _
        $region16: #{tpu_custom_call.1} parent=11 // pred_fallthru
          _
        // Predicated region
        $region17: #{tpu_custom_call.1} parent=11 // pred_check
          %p168 = pneg %p82
        $region18: #{tpu_custom_call.1} parent=11 // pred_check_branch
          %170 = sbr.rel (%p168) target = $region20
        $region19: #{tpu_custom_call.1} parent=11 // pred_region
          _
        $region20: #{tpu_custom_call.1} parent=11 // pred_fallthru
          _
        // Predicated region
        $region21: #{tpu_custom_call.1} parent=11 // pred_check
          %p171 = pneg %p103
        $region22: #{tpu_custom_call.1} parent=11 // pred_check_branch
          %173 = sbr.rel (%p171) target = $region24
        $region23: #{tpu_custom_call.1} parent=11 // pred_region
          _
        $region24: #{tpu_custom_call.1} parent=11 // pred_fallthru
          _
        // Predicated region
        $region25: #{tpu_custom_call.1} parent=11 // pred_check
          %p174 = pneg %p124
        $region26: #{tpu_custom_call.1} parent=11 // pred_check_branch
          %176 = sbr.rel (%p174) target = $region28
        $region27: #{tpu_custom_call.1} parent=11 // pred_region
          _
        $region28: #{tpu_custom_call.1} parent=11 // pred_fallthru
          _
      $region12: #{tpu_custom_call.1} parent=5 // pred_fallthru
        _
      %p177 = scmp.lt.s32.totalorder %s14, 2
      // Predicated region
      $region29: #{tpu_custom_call.1} parent=5 // pred_check
        %p178 = pneg %p177
      $region30: #{tpu_custom_call.1} parent=5 // pred_check_branch
        %180 = sbr.rel (%p178) target = $region32
      $region31: #{tpu_custom_call.1} parent=5 // pred_region
        // Predicated region
        $region33: #{tpu_custom_call.1} parent=31 // pred_check
          %p181 = pneg %p34
        $region34: #{tpu_custom_call.1} parent=31 // pred_check_branch
          %183 = sbr.rel (%p181) target = $region36
        $region35: #{tpu_custom_call.1} parent=31 // pred_region
          %p184 = scmp.lt.s32.totalorder %s14, 1
          %s185 = scalar_select %p184, %s14, 1
          %s186 = smul.addr %s185, 2
          %s187 = scalar_lea.vmem %s0, %s186
        $region36: #{tpu_custom_call.1} parent=31 // pred_fallthru
          _
      $region32: #{tpu_custom_call.1} parent=5 // pred_fallthru
        _
      %p188 = scmp.le.s32.totalorder 1, %s14
      %p189 = scmp.lt.s32.totalorder %s14, 3
      %p190 = pnand %p188, %p189
      %p191 = pneg %p190
      // Predicated region
      $region37: #{tpu_custom_call.1} parent=5 // pred_check
        _
      $region38: #{tpu_custom_call.1} parent=5 // pred_check_branch
        %193 = sbr.rel (%p190) target = $region40
      $region39: #{tpu_custom_call.1} parent=5 // pred_region
        %s194 = ssub.s32 %s14, 1
        %p195 = scmp.lt.s32.totalorder %s19, 1
        %s196 = scalar_select %p195, %s19, 1
        %s197 = smul.addr %s196, 2
        %s198 = scalar_lea.vmem %s0, %s197
        %p199 = pneg %p40
        %p200 = pneg %p37
        %p201 = pneg %p61
        %p202 = pneg %p58
        %p203 = pneg %p82
        %p204 = pneg %p79
        %p205 = pneg %p103
        %p206 = pneg %p100
        %p207 = pneg %p124
        %p208 = pneg %p121
        %p209 = pneg %p150
        %p210 = pneg %p147
        %s211 = sand.u32 %s137, 1
        %s212 = scalar_lea.sflag [#allocation3], %s211
        %s213 = sand.u32 %s137, 1
        %s214 = smul.addr %s213, 8
        %s215 = scalar_lea.vmem [#allocation2], %s214
        %p216 = scmp.lt.s32.totalorder %s19, 1
        %s217 = scalar_select %p216, %s19, 1
        %s218 = smul.addr %s217, 2
        %s219 = scalar_lea.vmem %s0, %s218
        %v221 = vld [vmem:[%s219] sm:$0x3]
        %v222 = vld [vmem:[%s1] sm:$0xff]
        %v223 = vld [vmem:[%s1 + $0x8] sm:$0xff]
        %v224 = vld [vmem:[%s1 + $0x10] sm:$0xff]
        %v225 = vld [vmem:[%s1 + $0x18] sm:$0xff]
        %v226 = vld [vmem:[%s1 + $0x20] sm:$0xff]
        %v227 = vld [vmem:[%s1 + $0x28] sm:$0xff]
        %v228 = vld [vmem:[%s1 + $0x30] sm:$0xff]
        %v229 = vld [vmem:[%s1 + $0x38] sm:$0xff]
        %v230 = vld [vmem:[%s1 + $0x40] sm:$0xff]
        %v231 = vld [vmem:[%s1 + $0x48] sm:$0xff]
        %v232 = vld [vmem:[%s1 + $0x50] sm:$0xff]
        %v233 = vld [vmem:[%s1 + $0x58] sm:$0xff]
        %v234 = vld [vmem:[%s1 + $0x60] sm:$0xff]
        %v235 = vld [vmem:[%s1 + $0x68] sm:$0xff]
        %v236 = vld [vmem:[%s1 + $0x70] sm:$0xff]
        %v237 = vld [vmem:[%s1 + $0x78] sm:$0xff]
        %v238 = vld [vmem:[%s4] sm:$0xff]
        %v239 = vld [vmem:[%s4 + $0x8] sm:$0xff]
        %v240 = vld [vmem:[%s4 + $0x10] sm:$0xff]
        %v241 = vld [vmem:[%s4 + $0x18] sm:$0xff]
        %v242 = vld [vmem:[%s4 + $0x20] sm:$0xff]
        %v243 = vld [vmem:[%s4 + $0x28] sm:$0xff]
        %v244 = vld [vmem:[%s4 + $0x30] sm:$0xff]
        %v245 = vld [vmem:[%s4 + $0x38] sm:$0xff]
        %v246 = vld [vmem:[%s4 + $0x40] sm:$0xff]
        %v247 = vld [vmem:[%s4 + $0x48] sm:$0xff]
        %v248 = vld [vmem:[%s4 + $0x50] sm:$0xff]
        %v249 = vld [vmem:[%s4 + $0x58] sm:$0xff]
        %v250 = vld [vmem:[%s4 + $0x60] sm:$0xff]
        %v251 = vld [vmem:[%s4 + $0x68] sm:$0xff]
        %v252 = vld [vmem:[%s4 + $0x70] sm:$0xff]
        %v253 = vld [vmem:[%s4 + $0x78] sm:$0xff]
        %255 = vset.pattern.permute.xlu0 0
        %256 = vperm.xlu0 %255, %v222
        %v257 = vpop.permute.xlu0 %256
        %260 = vset.pattern.permute.xlu0 0
        %261 = vperm.xlu0 %260, %v223
        %v262 = vpop.permute.xlu0 %261
        %265 = vset.pattern.permute.xlu0 0
        %266 = vperm.xlu0 %265, %v224
        %v267 = vpop.permute.xlu0 %266
        %270 = vset.pattern.permute.xlu0 0
        %271 = vperm.xlu0 %270, %v225
        %v272 = vpop.permute.xlu0 %271
        %275 = vset.pattern.permute.xlu0 0
        %276 = vperm.xlu0 %275, %v226
        %v277 = vpop.permute.xlu0 %276
        %280 = vset.pattern.permute.xlu0 0
        %281 = vperm.xlu0 %280, %v227
        %v282 = vpop.permute.xlu0 %281
        %285 = vset.pattern.permute.xlu0 0
        %286 = vperm.xlu0 %285, %v228
        %v287 = vpop.permute.xlu0 %286
        %290 = vset.pattern.permute.xlu0 0
        %291 = vperm.xlu0 %290, %v229
        %v292 = vpop.permute.xlu0 %291
        %295 = vset.pattern.permute.xlu0 0
        %296 = vperm.xlu0 %295, %v230
        %v297 = vpop.permute.xlu0 %296
        %300 = vset.pattern.permute.xlu0 0
        %301 = vperm.xlu0 %300, %v231
        %v302 = vpop.permute.xlu0 %301
        %305 = vset.pattern.permute.xlu0 0
        %306 = vperm.xlu0 %305, %v232
        %v307 = vpop.permute.xlu0 %306
        %310 = vset.pattern.permute.xlu0 0
        %311 = vperm.xlu0 %310, %v233
        %v312 = vpop.permute.xlu0 %311
        %315 = vset.pattern.permute.xlu0 0
        %316 = vperm.xlu0 %315, %v234
        %v317 = vpop.permute.xlu0 %316
        %320 = vset.pattern.permute.xlu0 0
        %321 = vperm.xlu0 %320, %v235
        %v322 = vpop.permute.xlu0 %321
        %325 = vset.pattern.permute.xlu0 0
        %326 = vperm.xlu0 %325, %v236
        %v327 = vpop.permute.xlu0 %326
        %330 = vset.pattern.permute.xlu0 0
        %331 = vperm.xlu0 %330, %v237
        %v332 = vpop.permute.xlu0 %331
        %v334 = vlaneseq
        %v335 = vshrl.u32 %v334, 7
        %v336 = vsub.s32 0, %v335
        %v337 = vrot.slane %v221, %v336
        %v338 = vmul.f32 %v257, %v337
        %v339 = vmul.f32 %v262, %v337
        %v340 = vmul.f32 %v267, %v337
        %v341 = vmul.f32 %v272, %v337
        %v342 = vmul.f32 %v277, %v337
        %v343 = vmul.f32 %v282, %v337
        %v344 = vmul.f32 %v287, %v337
        %v345 = vmul.f32 %v292, %v337
        %v346 = vmul.f32 %v297, %v337
        %v347 = vmul.f32 %v302, %v337
        %v348 = vmul.f32 %v307, %v337
        %v349 = vmul.f32 %v312, %v337
        %v350 = vmul.f32 %v317, %v337
        %v351 = vmul.f32 %v322, %v337
        %v352 = vmul.f32 %v327, %v337
        %v353 = vmul.f32 %v332, %v337
        %354 = vset.pattern.permute.xlu0 1
        %355 = vperm.xlu0 %354, %v222
        %v356 = vpop.permute.xlu0 %355
        %358 = vset.pattern.permute.xlu0 1
        %359 = vperm.xlu0 %358, %v223
        %v360 = vpop.permute.xlu0 %359
        %362 = vset.pattern.permute.xlu0 1
        %363 = vperm.xlu0 %362, %v224
        %v364 = vpop.permute.xlu0 %363
        %366 = vset.pattern.permute.xlu0 1
        %367 = vperm.xlu0 %366, %v225
        %v368 = vpop.permute.xlu0 %367
        %370 = vset.pattern.permute.xlu0 1
        %371 = vperm.xlu0 %370, %v226
        %v372 = vpop.permute.xlu0 %371
        %374 = vset.pattern.permute.xlu0 1
        %375 = vperm.xlu0 %374, %v227
        %v376 = vpop.permute.xlu0 %375
        %378 = vset.pattern.permute.xlu0 1
        %379 = vperm.xlu0 %378, %v228
        %v380 = vpop.permute.xlu0 %379
        %382 = vset.pattern.permute.xlu0 1
        %383 = vperm.xlu0 %382, %v229
        %v384 = vpop.permute.xlu0 %383
        %386 = vset.pattern.permute.xlu0 1
        %387 = vperm.xlu0 %386, %v230
        %v388 = vpop.permute.xlu0 %387
        %390 = vset.pattern.permute.xlu0 1
        %391 = vperm.xlu0 %390, %v231
        %v392 = vpop.permute.xlu0 %391
        %394 = vset.pattern.permute.xlu0 1
        %395 = vperm.xlu0 %394, %v232
        %v396 = vpop.permute.xlu0 %395
        %398 = vset.pattern.permute.xlu0 1
        %399 = vperm.xlu0 %398, %v233
        %v400 = vpop.permute.xlu0 %399
        %402 = vset.pattern.permute.xlu0 1
        %403 = vperm.xlu0 %402, %v234
        %v404 = vpop.permute.xlu0 %403
        %406 = vset.pattern.permute.xlu0 1
        %407 = vperm.xlu0 %406, %v235
        %v408 = vpop.permute.xlu0 %407
        %410 = vset.pattern.permute.xlu0 1
        %411 = vperm.xlu0 %410, %v236
        %v412 = vpop.permute.xlu0 %411
        %414 = vset.pattern.permute.xlu0 1
        %415 = vperm.xlu0 %414, %v237
        %v416 = vpop.permute.xlu0 %415
        %v418 = vlaneseq
        %v419 = vshrl.u32 %v418, 7
        %v420 = vsub.s32 1, %v419
        %v421 = vrot.slane %v221, %v420
        %v422 = vmul.f32 %v356, %v421
        %v423 = vmul.f32 %v360, %v421
        %v424 = vmul.f32 %v364, %v421
        %v425 = vmul.f32 %v368, %v421
        %v426 = vmul.f32 %v372, %v421
        %v427 = vmul.f32 %v376, %v421
        %v428 = vmul.f32 %v380, %v421
        %v429 = vmul.f32 %v384, %v421
        %v430 = vmul.f32 %v388, %v421
        %v431 = vmul.f32 %v392, %v421
        %v432 = vmul.f32 %v396, %v421
        %v433 = vmul.f32 %v400, %v421
        %v434 = vmul.f32 %v404, %v421
        %v435 = vmul.f32 %v408, %v421
        %v436 = vmul.f32 %v412, %v421
        %v437 = vmul.f32 %v416, %v421
        %v438 = vadd.f32 %v338, %v422
        %v439 = vadd.f32 %v339, %v423
        %v440 = vadd.f32 %v340, %v424
        %v441 = vadd.f32 %v341, %v425
        %v442 = vadd.f32 %v342, %v426
        %v443 = vadd.f32 %v343, %v427
        %v444 = vadd.f32 %v344, %v428
        %v445 = vadd.f32 %v345, %v429
        %v446 = vadd.f32 %v346, %v430
        %v447 = vadd.f32 %v347, %v431
        %v448 = vadd.f32 %v348, %v432
        %v449 = vadd.f32 %v349, %v433
        %v450 = vadd.f32 %v350, %v434
        %v451 = vadd.f32 %v351, %v435
        %v452 = vadd.f32 %v352, %v436
        %v453 = vadd.f32 %v353, %v437
        %455 = vset.pattern.permute.xlu0 0
        %456 = vperm.xlu0 %455, %v238
        %v457 = vpop.permute.xlu0 %456
        %460 = vset.pattern.permute.xlu0 0
        %461 = vperm.xlu0 %460, %v239
        %v462 = vpop.permute.xlu0 %461
        %465 = vset.pattern.permute.xlu0 0
        %466 = vperm.xlu0 %465, %v240
        %v467 = vpop.permute.xlu0 %466
        %470 = vset.pattern.permute.xlu0 0
        %471 = vperm.xlu0 %470, %v241
        %v472 = vpop.permute.xlu0 %471
        %475 = vset.pattern.permute.xlu0 0
        %476 = vperm.xlu0 %475, %v242
        %v477 = vpop.permute.xlu0 %476
        %480 = vset.pattern.permute.xlu0 0
        %481 = vperm.xlu0 %480, %v243
        %v482 = vpop.permute.xlu0 %481
        %485 = vset.pattern.permute.xlu0 0
        %486 = vperm.xlu0 %485, %v244
        %v487 = vpop.permute.xlu0 %486
        %490 = vset.pattern.permute.xlu0 0
        %491 = vperm.xlu0 %490, %v245
        %v492 = vpop.permute.xlu0 %491
        %495 = vset.pattern.permute.xlu0 0
        %496 = vperm.xlu0 %495, %v246
        %v497 = vpop.permute.xlu0 %496
        %500 = vset.pattern.permute.xlu0 0
        %501 = vperm.xlu0 %500, %v247
        %v502 = vpop.permute.xlu0 %501
        %505 = vset.pattern.permute.xlu0 0
        %506 = vperm.xlu0 %505, %v248
        %v507 = vpop.permute.xlu0 %506
        %510 = vset.pattern.permute.xlu0 0
        %511 = vperm.xlu0 %510, %v249
        %v512 = vpop.permute.xlu0 %511
        %515 = vset.pattern.permute.xlu0 0
        %516 = vperm.xlu0 %515, %v250
        %v517 = vpop.permute.xlu0 %516
        %520 = vset.pattern.permute.xlu0 0
        %521 = vperm.xlu0 %520, %v251
        %v522 = vpop.permute.xlu0 %521
        %525 = vset.pattern.permute.xlu0 0
        %526 = vperm.xlu0 %525, %v252
        %v527 = vpop.permute.xlu0 %526
        %530 = vset.pattern.permute.xlu0 0
        %531 = vperm.xlu0 %530, %v253
        %v532 = vpop.permute.xlu0 %531
        %v534 = vadd.f32 %v438, %v457
        %v535 = vadd.f32 %v439, %v462
        %v536 = vadd.f32 %v440, %v467
        %v537 = vadd.f32 %v441, %v472
        %v538 = vadd.f32 %v442, %v477
        %v539 = vadd.f32 %v443, %v482
        %v540 = vadd.f32 %v444, %v487
        %v541 = vadd.f32 %v445, %v492
        %v542 = vadd.f32 %v446, %v497
        %v543 = vadd.f32 %v447, %v502
        %v544 = vadd.f32 %v448, %v507
        %v545 = vadd.f32 %v449, %v512
        %v546 = vadd.f32 %v450, %v517
        %v547 = vadd.f32 %v451, %v522
        %v548 = vadd.f32 %v452, %v527
        %v549 = vadd.f32 %v453, %v532
        %v550 = vmul.f32 %v534, 0.5
        %v551 = vmul.f32 %v535, 0.5
        %v552 = vmul.f32 %v536, 0.5
        %v553 = vmul.f32 %v537, 0.5
        %v554 = vmul.f32 %v538, 0.5
        %v555 = vmul.f32 %v539, 0.5
        %v556 = vmul.f32 %v540, 0.5
        %v557 = vmul.f32 %v541, 0.5
        %v558 = vmul.f32 %v542, 0.5
        %v559 = vmul.f32 %v543, 0.5
        %v560 = vmul.f32 %v544, 0.5
        %v561 = vmul.f32 %v545, 0.5
        %v562 = vmul.f32 %v546, 0.5
        %v563 = vmul.f32 %v547, 0.5
        %v564 = vmul.f32 %v548, 0.5
        %v565 = vmul.f32 %v549, 0.5
        %v566 = vtanh.pop %v550
        %v567 = vtanh.pop %v551
        %v568 = vtanh.pop %v552
        %v569 = vtanh.pop %v553
        %v570 = vtanh.pop %v554
        %v571 = vtanh.pop %v555
        %v572 = vtanh.pop %v556
        %v573 = vtanh.pop %v557
        %v574 = vtanh.pop %v558
        %v575 = vtanh.pop %v559
        %v576 = vtanh.pop %v560
        %v577 = vtanh.pop %v561
        %v578 = vtanh.pop %v562
        %v579 = vtanh.pop %v563
        %v580 = vtanh.pop %v564
        %v581 = vtanh.pop %v565
        %v582 = vadd.f32 %v566, 1.0
        %v583 = vadd.f32 %v567, 1.0
        %v584 = vadd.f32 %v568, 1.0
        %v585 = vadd.f32 %v569, 1.0
        %v586 = vadd.f32 %v570, 1.0
        %v587 = vadd.f32 %v571, 1.0
        %v588 = vadd.f32 %v572, 1.0
        %v589 = vadd.f32 %v573, 1.0
        %v590 = vadd.f32 %v574, 1.0
        %v591 = vadd.f32 %v575, 1.0
        %v592 = vadd.f32 %v576, 1.0
        %v593 = vadd.f32 %v577, 1.0
        %v594 = vadd.f32 %v578, 1.0
        %v595 = vadd.f32 %v579, 1.0
        %v596 = vadd.f32 %v580, 1.0
        %v597 = vadd.f32 %v581, 1.0
        %v598 = vmul.f32 %v550, %v582
        %v599 = vmul.f32 %v551, %v583
        %v600 = vmul.f32 %v552, %v584
        %v601 = vmul.f32 %v553, %v585
        %v602 = vmul.f32 %v554, %v586
        %v603 = vmul.f32 %v555, %v587
        %v604 = vmul.f32 %v556, %v588
        %v605 = vmul.f32 %v557, %v589
        %v606 = vmul.f32 %v558, %v590
        %v607 = vmul.f32 %v559, %v591
        %v608 = vmul.f32 %v560, %v592
        %v609 = vmul.f32 %v561, %v593
        %v610 = vmul.f32 %v562, %v594
        %v611 = vmul.f32 %v563, %v595
        %v612 = vmul.f32 %v564, %v596
        %v613 = vmul.f32 %v565, %v597
        %v614 = vld [vmem:[%s2] sm:$0xf]
        %v615 = vld [vmem:[%s2 + $0x4] sm:$0xf]
        %v616 = vld [vmem:[%s2 + $0x8] sm:$0xf]
        %v617 = vld [vmem:[%s2 + $0xc] sm:$0xf]
        %v618 = vld [vmem:[%s2 + $0x10] sm:$0xf]
        %v619 = vld [vmem:[%s2 + $0x14] sm:$0xf]
        %v620 = vld [vmem:[%s2 + $0x18] sm:$0xf]
        %v621 = vld [vmem:[%s2 + $0x1c] sm:$0xf]
        %v622 = vld [vmem:[%s2 + $0x20] sm:$0xf]
        %v623 = vld [vmem:[%s2 + $0x24] sm:$0xf]
        %v624 = vld [vmem:[%s2 + $0x28] sm:$0xf]
        %v625 = vld [vmem:[%s2 + $0x2c] sm:$0xf]
        %v626 = vld [vmem:[%s2 + $0x30] sm:$0xf]
        %v627 = vld [vmem:[%s2 + $0x34] sm:$0xf]
        %v628 = vld [vmem:[%s2 + $0x38] sm:$0xf]
        %v629 = vld [vmem:[%s2 + $0x3c] sm:$0xf]
        %v630 = vpack.c.bf16 %v599, %v598
        %v631 = vpack.c.bf16 %v601, %v600
        %v632 = vpack.c.bf16 %v603, %v602
        %v633 = vpack.c.bf16 %v605, %v604
        %v634 = vpack.c.bf16 %v607, %v606
        %v635 = vpack.c.bf16 %v609, %v608
        %v636 = vpack.c.bf16 %v611, %v610
        %v637 = vpack.c.bf16 %v613, %v612
        %638 = vset.pattern.permute.xlu0 1
        %639 = vperm.xlu0 %638, %v238
        %v640 = vpop.permute.xlu0 %639
        %642 = vset.pattern.permute.xlu0 1
        %643 = vperm.xlu0 %642, %v239
        %v644 = vpop.permute.xlu0 %643
        %646 = vset.pattern.permute.xlu0 1
        %647 = vperm.xlu0 %646, %v240
        %v648 = vpop.permute.xlu0 %647
        %650 = vset.pattern.permute.xlu0 1
        %651 = vperm.xlu0 %650, %v241
        %v652 = vpop.permute.xlu0 %651
        %654 = vset.pattern.permute.xlu0 1
        %655 = vperm.xlu0 %654, %v242
        %v656 = vpop.permute.xlu0 %655
        %658 = vset.pattern.permute.xlu0 1
        %659 = vperm.xlu0 %658, %v243
        %v660 = vpop.permute.xlu0 %659
        %662 = vset.pattern.permute.xlu0 1
        %663 = vperm.xlu0 %662, %v244
        %v664 = vpop.permute.xlu0 %663
        %666 = vset.pattern.permute.xlu0 1
        %667 = vperm.xlu0 %666, %v245
        %v668 = vpop.permute.xlu0 %667
        %670 = vset.pattern.permute.xlu0 1
        %671 = vperm.xlu0 %670, %v246
        %v672 = vpop.permute.xlu0 %671
        %674 = vset.pattern.permute.xlu0 1
        %675 = vperm.xlu0 %674, %v247
        %v676 = vpop.permute.xlu0 %675
        %678 = vset.pattern.permute.xlu0 1
        %679 = vperm.xlu0 %678, %v248
        %v680 = vpop.permute.xlu0 %679
        %682 = vset.pattern.permute.xlu0 1
        %683 = vperm.xlu0 %682, %v249
        %v684 = vpop.permute.xlu0 %683
        %686 = vset.pattern.permute.xlu0 1
        %687 = vperm.xlu0 %686, %v250
        %v688 = vpop.permute.xlu0 %687
        %690 = vset.pattern.permute.xlu0 1
        %691 = vperm.xlu0 %690, %v251
        %v692 = vpop.permute.xlu0 %691
        %694 = vset.pattern.permute.xlu0 1
        %695 = vperm.xlu0 %694, %v252
        %v696 = vpop.permute.xlu0 %695
        %698 = vset.pattern.permute.xlu0 1
        %699 = vperm.xlu0 %698, %v253
        %v700 = vpop.permute.xlu0 %699
        %v718 = vunpack.c.l.b16 %v614
        %v719 = vunpack.c.l.b16 %v615
        %v720 = vunpack.c.l.b16 %v616
        %v721 = vunpack.c.l.b16 %v617
        %v722 = vunpack.c.l.b16 %v618
        %v723 = vunpack.c.l.b16 %v619
        %v724 = vunpack.c.l.b16 %v620
        %v725 = vunpack.c.l.b16 %v621
        %v726 = vunpack.c.l.b16 %v622
        %v727 = vunpack.c.l.b16 %v623
        %v728 = vunpack.c.l.b16 %v624
        %v729 = vunpack.c.l.b16 %v625
        %v730 = vunpack.c.l.b16 %v626
        %v731 = vunpack.c.l.b16 %v627
        %v732 = vunpack.c.l.b16 %v628
        %v733 = vunpack.c.l.b16 %v629
        %v734 = vpack.c.b16 %v719, %v718
        %v735 = vpack.c.b16 %v721, %v720
        %v736 = vpack.c.b16 %v723, %v722
        %v737 = vpack.c.b16 %v725, %v724
        %v738 = vpack.c.b16 %v727, %v726
        %v739 = vpack.c.b16 %v729, %v728
        %v740 = vpack.c.b16 %v731, %v730
        %v741 = vpack.c.b16 %v733, %v732
        %750 = vmatprep.subr.bf16.mxu0 0
        %751 = vmatpush1.bf16.msra.mxu0 %v630
        %752 = vmatprep.subr.bf16.mxu0 0
        %753 = vmatpush1.bf16.msra.mxu0 %v631
        %754 = vmatprep.subr.bf16.mxu0 0
        %755 = vmatpush1.bf16.msra.mxu0 %v632
        %756 = vmatprep.subr.bf16.mxu0 0
        %757 = vmatpush1.bf16.msra.mxu0 %v633
        %758 = vmatprep.subr.bf16.mxu0 0
        %759 = vmatpush1.bf16.msra.mxu0 %v634
        %760 = vmatprep.subr.bf16.mxu0 0
        %761 = vmatpush1.bf16.msra.mxu0 %v635
        %762 = vmatprep.subr.bf16.mxu0 0
        %763 = vmatpush1.bf16.msra.mxu0 %v636
        %764 = vmatprep.subr.bf16.mxu0 0
        %765 = vmatpush1.bf16.msra.mxu0 %v637
        %766 = vmatprep.subr.bf16.mxu0 0
        %767 = vmatpush1.bf16.msra.mxu0 0
        %768 = vmatprep.subr.bf16.mxu0 0
        %769 = vmatpush1.bf16.msra.mxu0 0
        %770 = vmatprep.subr.bf16.mxu0 0
        %771 = vmatpush1.bf16.msra.mxu0 0
        %772 = vmatprep.subr.bf16.mxu0 0
        %773 = vmatpush1.bf16.msra.mxu0 0
        %774 = vmatprep.subr.bf16.mxu0 0
        %775 = vmatpush1.bf16.msra.mxu0 0
        %776 = vmatprep.subr.bf16.mxu0 0
        %777 = vmatpush1.bf16.msra.mxu0 0
        %778 = vmatprep.subr.bf16.mxu0 0
        %779 = vmatpush1.bf16.msra.mxu0 0
        %780 = vmatprep.subr.bf16.mxu0 0
        %781 = vmatpush1.bf16.msra.mxu0 0
        %782 = vmatprep.mubr.bf16.mxu0 0
        %783 = vmatmul.mubr.bf16.gmra.mrb[0].mxu0 %v734
        %v784 = vpop.f32.mrb[0].mxu0
        %v785 = vadd.f32 %v640, %v784
        %v786 = vpop.f32.mrb[0].mxu0
        %v787 = vpop.f32.mrb[0].mxu0
        %v788 = vadd.f32 %v644, %v787
        %v789 = vpop.f32.mrb[0].mxu0
        %790 = vmatprep.mubr.bf16.mxu0 0
        %791 = vmatmul.mubr.bf16.gmra.mrb[0].mxu0 %v735
        %v792 = vpop.f32.mrb[0].mxu0
        %v793 = vadd.f32 %v648, %v792
        %v794 = vpop.f32.mrb[0].mxu0
        %v795 = vpop.f32.mrb[0].mxu0
        %v796 = vadd.f32 %v652, %v795
        %v797 = vpop.f32.mrb[0].mxu0
        %798 = vmatprep.mubr.bf16.mxu0 0
        %799 = vmatmul.mubr.bf16.gmra.mrb[0].mxu0 %v736
        %v800 = vpop.f32.mrb[0].mxu0
        %v801 = vadd.f32 %v656, %v800
        %v802 = vpop.f32.mrb[0].mxu0
        %v803 = vpop.f32.mrb[0].mxu0
        %v804 = vadd.f32 %v660, %v803
        %v805 = vpop.f32.mrb[0].mxu0
        %806 = vmatprep.mubr.bf16.mxu0 0
        %807 = vmatmul.mubr.bf16.gmra.mrb[0].mxu0 %v737
        %v808 = vpop.f32.mrb[0].mxu0
        %v809 = vadd.f32 %v664, %v808
        %v810 = vpop.f32.mrb[0].mxu0
        %v811 = vpop.f32.mrb[0].mxu0
        %v812 = vadd.f32 %v668, %v811
        %v813 = vpop.f32.mrb[0].mxu0
        %814 = vmatprep.mubr.bf16.mxu0 0
        %815 = vmatmul.mubr.bf16.gmra.mrb[0].mxu0 %v738
        %v816 = vpop.f32.mrb[0].mxu0
        %v817 = vadd.f32 %v672, %v816
        %v818 = vpop.f32.mrb[0].mxu0
        %v819 = vpop.f32.mrb[0].mxu0
        %v820 = vadd.f32 %v676, %v819
        %v821 = vpop.f32.mrb[0].mxu0
        %822 = vmatprep.mubr.bf16.mxu0 0
        %823 = vmatmul.mubr.bf16.gmra.mrb[0].mxu0 %v739
        %v824 = vpop.f32.mrb[0].mxu0
        %v825 = vadd.f32 %v680, %v824
        %v826 = vpop.f32.mrb[0].mxu0
        %v827 = vpop.f32.mrb[0].mxu0
        %v828 = vadd.f32 %v684, %v827
        %v829 = vpop.f32.mrb[0].mxu0
        %830 = vmatprep.mubr.bf16.mxu0 0
        %831 = vmatmul.mubr.bf16.gmra.mrb[0].mxu0 %v740
        %v832 = vpop.f32.mrb[0].mxu0
        %v833 = vadd.f32 %v688, %v832
        %v834 = vpop.f32.mrb[0].mxu0
        %v835 = vpop.f32.mrb[0].mxu0
        %v836 = vadd.f32 %v692, %v835
        %v837 = vpop.f32.mrb[0].mxu0
        %838 = vmatprep.mubr.bf16.mxu0 0
        %839 = vmatmul.mubr.bf16.gmra.mrb[0].mxu0 %v741
        %v840 = vpop.f32.mrb[0].mxu0
        %v841 = vadd.f32 %v696, %v840
        %v842 = vpop.f32.mrb[0].mxu0
        %v843 = vpop.f32.mrb[0].mxu0
        %v844 = vadd.f32 %v700, %v843
        %v845 = vpop.f32.mrb[0].mxu0
        %846 = vdwg.mxu0
        %v847 = vmul.f32 %v785, 0.5
        %v848 = vmul.f32 %v788, 0.5
        %v849 = vmul.f32 %v793, 0.5
        %v850 = vmul.f32 %v796, 0.5
        %v851 = vmul.f32 %v801, 0.5
        %v852 = vmul.f32 %v804, 0.5
        %v853 = vmul.f32 %v809, 0.5
        %v854 = vmul.f32 %v812, 0.5
        %v855 = vmul.f32 %v817, 0.5
        %v856 = vmul.f32 %v820, 0.5
        %v857 = vmul.f32 %v825, 0.5
        %v858 = vmul.f32 %v828, 0.5
        %v859 = vmul.f32 %v833, 0.5
        %v860 = vmul.f32 %v836, 0.5
        %v861 = vmul.f32 %v841, 0.5
        %v862 = vmul.f32 %v844, 0.5
        %v863 = vtanh.pop %v847
        %v864 = vtanh.pop %v848
        %v865 = vtanh.pop %v849
        %v866 = vtanh.pop %v850
        %v867 = vtanh.pop %v851
        %v868 = vtanh.pop %v852
        %v869 = vtanh.pop %v853
        %v870 = vtanh.pop %v854
        %v871 = vtanh.pop %v855
        %v872 = vtanh.pop %v856
        %v873 = vtanh.pop %v857
        %v874 = vtanh.pop %v858
        %v875 = vtanh.pop %v859
        %v876 = vtanh.pop %v860
        %v877 = vtanh.pop %v861
        %v878 = vtanh.pop %v862
        %v879 = vadd.f32 %v863, 1.0
        %v880 = vadd.f32 %v864, 1.0
        %v881 = vadd.f32 %v865, 1.0
        %v882 = vadd.f32 %v866, 1.0
        %v883 = vadd.f32 %v867, 1.0
        %v884 = vadd.f32 %v868, 1.0
        %v885 = vadd.f32 %v869, 1.0
        %v886 = vadd.f32 %v870, 1.0
        %v887 = vadd.f32 %v871, 1.0
        %v888 = vadd.f32 %v872, 1.0
        %v889 = vadd.f32 %v873, 1.0
        %v890 = vadd.f32 %v874, 1.0
        %v891 = vadd.f32 %v875, 1.0
        %v892 = vadd.f32 %v876, 1.0
        %v893 = vadd.f32 %v877, 1.0
        %v894 = vadd.f32 %v878, 1.0
        %v895 = vmul.f32 %v847, %v879
        %v896 = vmul.f32 %v848, %v880
        %v897 = vmul.f32 %v849, %v881
        %v898 = vmul.f32 %v850, %v882
        %v899 = vmul.f32 %v851, %v883
        %v900 = vmul.f32 %v852, %v884
        %v901 = vmul.f32 %v853, %v885
        %v902 = vmul.f32 %v854, %v886
        %v903 = vmul.f32 %v855, %v887
        %v904 = vmul.f32 %v856, %v888
        %v905 = vmul.f32 %v857, %v889
        %v906 = vmul.f32 %v858, %v890
        %v907 = vmul.f32 %v859, %v891
        %v908 = vmul.f32 %v860, %v892
        %v909 = vmul.f32 %v861, %v893
        %v910 = vmul.f32 %v862, %v894
        %v911 = vld [vmem:[%s2 + $0x40] sm:$0xf]
        %v912 = vld [vmem:[%s2 + $0x44] sm:$0xf]
        %v913 = vld [vmem:[%s2 + $0x48] sm:$0xf]
        %v914 = vld [vmem:[%s2 + $0x4c] sm:$0xf]
        %v915 = vld [vmem:[%s2 + $0x50] sm:$0xf]
        %v916 = vld [vmem:[%s2 + $0x54] sm:$0xf]
        %v917 = vld [vmem:[%s2 + $0x58] sm:$0xf]
        %v918 = vld [vmem:[%s2 + $0x5c] sm:$0xf]
        %v919 = vld [vmem:[%s2 + $0x60] sm:$0xf]
        %v920 = vld [vmem:[%s2 + $0x64] sm:$0xf]
        %v921 = vld [vmem:[%s2 + $0x68] sm:$0xf]
        %v922 = vld [vmem:[%s2 + $0x6c] sm:$0xf]
        %v923 = vld [vmem:[%s2 + $0x70] sm:$0xf]
        %v924 = vld [vmem:[%s2 + $0x74] sm:$0xf]
        %v925 = vld [vmem:[%s2 + $0x78] sm:$0xf]
        %v926 = vld [vmem:[%s2 + $0x7c] sm:$0xf]
        %v927 = vpack.c.bf16 %v896, %v895
        %v928 = vpack.c.bf16 %v898, %v897
        %v929 = vpack.c.bf16 %v900, %v899
        %v930 = vpack.c.bf16 %v902, %v901
        %v931 = vpack.c.bf16 %v904, %v903
        %v932 = vpack.c.bf16 %v906, %v905
        %v933 = vpack.c.bf16 %v908, %v907
        %v934 = vpack.c.bf16 %v910, %v909
        %935 = vset.pattern.permute.xlu0 2
        %936 = vperm.xlu0 %935, %v238
        %v937 = vpop.permute.xlu0 %936
        %939 = vset.pattern.permute.xlu0 2
        %940 = vperm.xlu0 %939, %v239
        %v941 = vpop.permute.xlu0 %940
        %943 = vset.pattern.permute.xlu0 2
        %944 = vperm.xlu0 %943, %v240
        %v945 = vpop.permute.xlu0 %944
        %947 = vset.pattern.permute.xlu0 2
        %948 = vperm.xlu0 %947, %v241
        %v949 = vpop.permute.xlu0 %948
        %951 = vset.pattern.permute.xlu0 2
        %952 = vperm.xlu0 %951, %v242
        %v953 = vpop.permute.xlu0 %952
        %955 = vset.pattern.permute.xlu0 2
        %956 = vperm.xlu0 %955, %v243
        %v957 = vpop.permute.xlu0 %956
        %959 = vset.pattern.permute.xlu0 2
        %960 = vperm.xlu0 %959, %v244
        %v961 = vpop.permute.xlu0 %960
        %963 = vset.pattern.permute.xlu0 2
        %964 = vperm.xlu0 %963, %v245
        %v965 = vpop.permute.xlu0 %964
        %967 = vset.pattern.permute.xlu0 2
        %968 = vperm.xlu0 %967, %v246
        %v969 = vpop.permute.xlu0 %968
        %971 = vset.pattern.permute.xlu0 2
        %972 = vperm.xlu0 %971, %v247
        %v973 = vpop.permute.xlu0 %972
        %975 = vset.pattern.permute.xlu0 2
        %976 = vperm.xlu0 %975, %v248
        %v977 = vpop.permute.xlu0 %976
        %979 = vset.pattern.permute.xlu0 2
        %980 = vperm.xlu0 %979, %v249
        %v981 = vpop.permute.xlu0 %980
        %983 = vset.pattern.permute.xlu0 2
        %984 = vperm.xlu0 %983, %v250
        %v985 = vpop.permute.xlu0 %984
        %987 = vset.pattern.permute.xlu0 2
        %988 = vperm.xlu0 %987, %v251
        %v989 = vpop.permute.xlu0 %988
        %991 = vset.pattern.permute.xlu0 2
        %992 = vperm.xlu0 %991, %v252
        %v993 = vpop.permute.xlu0 %992
        %995 = vset.pattern.permute.xlu0 2
        %996 = vperm.xlu0 %995, %v253
        %v997 = vpop.permute.xlu0 %996
        %v1015 = vunpack.c.l.b16 %v911
        %v1016 = vunpack.c.l.b16 %v912
        %v1017 = vunpack.c.l.b16 %v913
        %v1018 = vunpack.c.l.b16 %v914
        %v1019 = vunpack.c.l.b16 %v915
        %v1020 = vunpack.c.l.b16 %v916
        %v1021 = vunpack.c.l.b16 %v917
        %v1022 = vunpack.c.l.b16 %v918
        %v1023 = vunpack.c.l.b16 %v919
        %v1024 = vunpack.c.l.b16 %v920
        %v1025 = vunpack.c.l.b16 %v921
        %v1026 = vunpack.c.l.b16 %v922
        %v1027 = vunpack.c.l.b16 %v923
        %v1028 = vunpack.c.l.b16 %v924
        %v1029 = vunpack.c.l.b16 %v925
        %v1030 = vunpack.c.l.b16 %v926
        %v1031 = vpack.c.b16 %v1016, %v1015
        %v1032 = vpack.c.b16 %v1018, %v1017
        %v1033 = vpack.c.b16 %v1020, %v1019
        %v1034 = vpack.c.b16 %v1022, %v1021
        %v1035 = vpack.c.b16 %v1024, %v1023
        %v1036 = vpack.c.b16 %v1026, %v1025
        %v1037 = vpack.c.b16 %v1028, %v1027
        %v1038 = vpack.c.b16 %v1030, %v1029
        %1047 = vmatprep.subr.bf16.mxu0 0
        %1048 = vmatpush1.bf16.msra.mxu0 %v927
        %1049 = vmatprep.subr.bf16.mxu0 0
        %1050 = vmatpush1.bf16.msra.mxu0 %v928
        %1051 = vmatprep.subr.bf16.mxu0 0
        %1052 = vmatpush1.bf16.msra.mxu0 %v929
        %1053 = vmatprep.subr.bf16.mxu0 0
        %1054 = vmatpush1.bf16.msra.mxu0 %v930
        %1055 = vmatprep.subr.bf16.mxu0 0
        %1056 = vmatpush1.bf16.msra.mxu0 %v931
        %1057 = vmatprep.subr.bf16.mxu0 0
        %1058 = vmatpush1.bf16.msra.mxu0 %v932
        %1059 = vmatprep.subr.bf16.mxu0 0
        %1060 = vmatpush1.bf16.msra.mxu0 %v933
        %1061 = vmatprep.subr.bf16.mxu0 0
        %1062 = vmatpush1.bf16.msra.mxu0 %v934
        %1063 = vmatprep.subr.bf16.mxu0 0
        %1064 = vmatpush1.bf16.msra.mxu0 0
        %1065 = vmatprep.subr.bf16.mxu0 0
        %1066 = vmatpush1.bf16.msra.mxu0 0
        %1067 = vmatprep.subr.bf16.mxu0 0
        %1068 = vmatpush1.bf16.msra.mxu0 0
        %1069 = vmatprep.subr.bf16.mxu0 0
        %1070 = vmatpush1.bf16.msra.mxu0 0
        %1071 = vmatprep.subr.bf16.mxu0 0
        %1072 = vmatpush1.bf16.msra.mxu0 0
        %1073 = vmatprep.subr.bf16.mxu0 0
        %1074 = vmatpush1.bf16.msra.mxu0 0
        %1075 = vmatprep.subr.bf16.mxu0 0
        %1076 = vmatpush1.bf16.msra.mxu0 0
        %1077 = vmatprep.subr.bf16.mxu0 0
        %1078 = vmatpush1.bf16.msra.mxu0 0
        %1079 = vmatprep.mubr.bf16.mxu0 0
        %1080 = vmatmul.mubr.bf16.gmra.mrb[0].mxu0 %v1031
        %v1081 = vpop.f32.mrb[0].mxu0
        %v1082 = vadd.f32 %v937, %v1081
        %v1083 = vpop.f32.mrb[0].mxu0
        %v1084 = vpop.f32.mrb[0].mxu0
        %v1085 = vadd.f32 %v941, %v1084
        %v1086 = vpop.f32.mrb[0].mxu0
        %1087 = vmatprep.mubr.bf16.mxu0 0
        %1088 = vmatmul.mubr.bf16.gmra.mrb[0].mxu0 %v1032
        %v1089 = vpop.f32.mrb[0].mxu0
        %v1090 = vadd.f32 %v945, %v1089
        %v1091 = vpop.f32.mrb[0].mxu0
        %v1092 = vpop.f32.mrb[0].mxu0
        %v1093 = vadd.f32 %v949, %v1092
        %v1094 = vpop.f32.mrb[0].mxu0
        %1095 = vmatprep.mubr.bf16.mxu0 0
        %1096 = vmatmul.mubr.bf16.gmra.mrb[0].mxu0 %v1033
        %v1097 = vpop.f32.mrb[0].mxu0
        %v1098 = vadd.f32 %v953, %v1097
        %v1099 = vpop.f32.mrb[0].mxu0
        %v1100 = vpop.f32.mrb[0].mxu0
        %v1101 = vadd.f32 %v957, %v1100
        %v1102 = vpop.f32.mrb[0].mxu0
        %1103 = vmatprep.mubr.bf16.mxu0 0
        %1104 = vmatmul.mubr.bf16.gmra.mrb[0].mxu0 %v1034
        %v1105 = vpop.f32.mrb[0].mxu0
        %v1106 = vadd.f32 %v961, %v1105
        %v1107 = vpop.f32.mrb[0].mxu0
        %v1108 = vpop.f32.mrb[0].mxu0
        %v1109 = vadd.f32 %v965, %v1108
        %v1110 = vpop.f32.mrb[0].mxu0
        %1111 = vmatprep.mubr.bf16.mxu0 0
        %1112 = vmatmul.mubr.bf16.gmra.mrb[0].mxu0 %v1035
        %v1113 = vpop.f32.mrb[0].mxu0
        %v1114 = vadd.f32 %v969, %v1113
        %v1115 = vpop.f32.mrb[0].mxu0
        %v1116 = vpop.f32.mrb[0].mxu0
        %v1117 = vadd.f32 %v973, %v1116
        %v1118 = vpop.f32.mrb[0].mxu0
        %1119 = vmatprep.mubr.bf16.mxu0 0
        %1120 = vmatmul.mubr.bf16.gmra.mrb[0].mxu0 %v1036
        %v1121 = vpop.f32.mrb[0].mxu0
        %v1122 = vadd.f32 %v977, %v1121
        %v1123 = vpop.f32.mrb[0].mxu0
        %v1124 = vpop.f32.mrb[0].mxu0
        %v1125 = vadd.f32 %v981, %v1124
        %v1126 = vpop.f32.mrb[0].mxu0
        %1127 = vmatprep.mubr.bf16.mxu0 0
        %1128 = vmatmul.mubr.bf16.gmra.mrb[0].mxu0 %v1037
        %v1129 = vpop.f32.mrb[0].mxu0
        %v1130 = vadd.f32 %v985, %v1129
        %v1131 = vpop.f32.mrb[0].mxu0
        %v1132 = vpop.f32.mrb[0].mxu0
        %v1133 = vadd.f32 %v989, %v1132
        %v1134 = vpop.f32.mrb[0].mxu0
        %1135 = vmatprep.mubr.bf16.mxu0 0
        %1136 = vmatmul.mubr.bf16.gmra.mrb[0].mxu0 %v1038
        %v1137 = vpop.f32.mrb[0].mxu0
        %v1138 = vadd.f32 %v993, %v1137
        %v1139 = vpop.f32.mrb[0].mxu0
        %v1140 = vpop.f32.mrb[0].mxu0
        %v1141 = vadd.f32 %v997, %v1140
        %v1142 = vpop.f32.mrb[0].mxu0
        %1143 = vdwg.mxu0
        %v1144 = vmul.f32 %v1082, 0.5
        %v1145 = vmul.f32 %v1085, 0.5
        %v1146 = vmul.f32 %v1090, 0.5
        %v1147 = vmul.f32 %v1093, 0.5
        %v1148 = vmul.f32 %v1098, 0.5
        %v1149 = vmul.f32 %v1101, 0.5
        %v1150 = vmul.f32 %v1106, 0.5
        %v1151 = vmul.f32 %v1109, 0.5
        %v1152 = vmul.f32 %v1114, 0.5
        %v1153 = vmul.f32 %v1117, 0.5
        %v1154 = vmul.f32 %v1122, 0.5
        %v1155 = vmul.f32 %v1125, 0.5
        %v1156 = vmul.f32 %v1130, 0.5
        %v1157 = vmul.f32 %v1133, 0.5
        %v1158 = vmul.f32 %v1138, 0.5
        %v1159 = vmul.f32 %v1141, 0.5
        %v1160 = vtanh.pop %v1144
        %v1161 = vtanh.pop %v1145
        %v1162 = vtanh.pop %v1146
        %v1163 = vtanh.pop %v1147
        %v1164 = vtanh.pop %v1148
        %v1165 = vtanh.pop %v1149
        %v1166 = vtanh.pop %v1150
        %v1167 = vtanh.pop %v1151
        %v1168 = vtanh.pop %v1152
        %v1169 = vtanh.pop %v1153
        %v1170 = vtanh.pop %v1154
        %v1171 = vtanh.pop %v1155
        %v1172 = vtanh.pop %v1156
        %v1173 = vtanh.pop %v1157
        %v1174 = vtanh.pop %v1158
        %v1175 = vtanh.pop %v1159
        %v1176 = vadd.f32 %v1160, 1.0
        %v1177 = vadd.f32 %v1161, 1.0
        %v1178 = vadd.f32 %v1162, 1.0
        %v1179 = vadd.f32 %v1163, 1.0
        %v1180 = vadd.f32 %v1164, 1.0
        %v1181 = vadd.f32 %v1165, 1.0
        %v1182 = vadd.f32 %v1166, 1.0
        %v1183 = vadd.f32 %v1167, 1.0
        %v1184 = vadd.f32 %v1168, 1.0
        %v1185 = vadd.f32 %v1169, 1.0
        %v1186 = vadd.f32 %v1170, 1.0
        %v1187 = vadd.f32 %v1171, 1.0
        %v1188 = vadd.f32 %v1172, 1.0
        %v1189 = vadd.f32 %v1173, 1.0
        %v1190 = vadd.f32 %v1174, 1.0
        %v1191 = vadd.f32 %v1175, 1.0
        %v1192 = vmul.f32 %v1144, %v1176
        %v1193 = vmul.f32 %v1145, %v1177
        %v1194 = vmul.f32 %v1146, %v1178
        %v1195 = vmul.f32 %v1147, %v1179
        %v1196 = vmul.f32 %v1148, %v1180
        %v1197 = vmul.f32 %v1149, %v1181
        %v1198 = vmul.f32 %v1150, %v1182
        %v1199 = vmul.f32 %v1151, %v1183
        %v1200 = vmul.f32 %v1152, %v1184
        %v1201 = vmul.f32 %v1153, %v1185
        %v1202 = vmul.f32 %v1154, %v1186
        %v1203 = vmul.f32 %v1155, %v1187
        %v1204 = vmul.f32 %v1156, %v1188
        %v1205 = vmul.f32 %v1157, %v1189
        %v1206 = vmul.f32 %v1158, %v1190
        %v1207 = vmul.f32 %v1159, %v1191
        %v1208 = vld [vmem:[%s3] sm:$0xf]
        %v1209 = vpack.c.bf16 %v1193, %v1192
        %v1210 = vpack.c.bf16 %v1195, %v1194
        %v1211 = vpack.c.bf16 %v1197, %v1196
        %v1212 = vpack.c.bf16 %v1199, %v1198
        %v1213 = vpack.c.bf16 %v1201, %v1200
        %v1214 = vpack.c.bf16 %v1203, %v1202
        %v1215 = vpack.c.bf16 %v1205, %v1204
        %v1216 = vpack.c.bf16 %v1207, %v1206
        %1217 = vset.pattern.permute.xlu0 3
        %1218 = vperm.xlu0 %1217, %v238
        %v1219 = vpop.permute.xlu0 %1218
        %1221 = vmatprep.subr.bf16.mxu0 0
        %1222 = vmatpush1.bf16.msra.mxu0 %v1209
        %1223 = vmatprep.subr.bf16.mxu0 0
        %1224 = vmatpush1.bf16.msra.mxu0 %v1210
        %1225 = vmatprep.subr.bf16.mxu0 0
        %1226 = vmatpush1.bf16.msra.mxu0 %v1211
        %1227 = vmatprep.subr.bf16.mxu0 0
        %1228 = vmatpush1.bf16.msra.mxu0 %v1212
        %1229 = vmatprep.subr.bf16.mxu0 0
        %1230 = vmatpush1.bf16.msra.mxu0 %v1213
        %1231 = vmatprep.subr.bf16.mxu0 0
        %1232 = vmatpush1.bf16.msra.mxu0 %v1214
        %1233 = vmatprep.subr.bf16.mxu0 0
        %1234 = vmatpush1.bf16.msra.mxu0 %v1215
        %1235 = vmatprep.subr.bf16.mxu0 0
        %1236 = vmatpush1.bf16.msra.mxu0 %v1216
        %1237 = vmatprep.subr.bf16.mxu0 0
        %1238 = vmatpush1.bf16.msra.mxu0 0
        %1239 = vmatprep.subr.bf16.mxu0 0
        %1240 = vmatpush1.bf16.msra.mxu0 0
        %1241 = vmatprep.subr.bf16.mxu0 0
        %1242 = vmatpush1.bf16.msra.mxu0 0
        %1243 = vmatprep.subr.bf16.mxu0 0
        %1244 = vmatpush1.bf16.msra.mxu0 0
        %1245 = vmatprep.subr.bf16.mxu0 0
        %1246 = vmatpush1.bf16.msra.mxu0 0
        %1247 = vmatprep.subr.bf16.mxu0 0
        %1248 = vmatpush1.bf16.msra.mxu0 0
        %1249 = vmatprep.subr.bf16.mxu0 0
        %1250 = vmatpush1.bf16.msra.mxu0 0
        %1251 = vmatprep.subr.bf16.mxu0 0
        %1252 = vmatpush1.bf16.msra.mxu0 0
        %1253 = vmatprep.mubr.bf16.mxu0 0
        %1254 = vmatmul.mubr.bf16.gmra.mrb[0].mxu0 %v1208
        %v1255 = vpop.f32.mrb[0].mxu0
        %v1256 = vadd.f32 %v1219, %v1255
        %v1257 = vpop.f32.mrb[0].mxu0
        %v1258 = vpop.f32.mrb[0].mxu0
        %v1259 = vpop.f32.mrb[0].mxu0
        %1260 = vdwg.mxu0
        %1261 = vst [vmem:[%s215] sm:$0xff] %v1256
        %s1262 = sand.u32 %s137, 1
        %s1263 = scalar_lea.sflag [#allocation3], %s1262
        %s1264 = sand.u32 %s137, 1
        %s1265 = smul.addr %s1264, 8
        %s1266 = scalar_lea.vmem [#allocation2], %s1265
        // Predicated region
        $region41: #{tpu_custom_call.1} parent=39 // pred_check
          %p1267 = pneg %p147
        $region42: #{tpu_custom_call.1} parent=39 // pred_check_branch
          %1269 = sbr.rel (%p1267) target = $region44
        $region43: #{tpu_custom_call.1} parent=39 // pred_region
          %s1271 = ssub.s32 128, 128
          %1272 = vsyncadd %s1263, %s1271
          %s1273 = smul.addr %s19, 128
          %s1274 = scalar_lea.hbm %s5, %s1273
          %s1276 = sshll.u32 %s1266, 4
          %s1277 = int_to_ptr.vmem [resolvable:$true] %s1276
          %1279 = dma.vmem_to_hbm [thread:$0]  %s1277, 128, %s1274, %s1263
        $region44: #{tpu_custom_call.1} parent=39 // pred_fallthru
          _
      $region40: #{tpu_custom_call.1} parent=5 // pred_fallthru
        _
      %p1280 = scmp.le.s32.totalorder 2, %s14
      // Predicated region
      $region45: #{tpu_custom_call.1} parent=5 // pred_check
        %p1281 = pneg %p1280
      $region46: #{tpu_custom_call.1} parent=5 // pred_check_branch
        %1283 = sbr.rel (%p1281) target = $region48
      $region47: #{tpu_custom_call.1} parent=5 // pred_region
        %s1284 = ssub.s32 %s14, 2
        // Predicated region
        $region49: #{tpu_custom_call.1} parent=47 // pred_check
          %p1285 = pneg %p153
        $region50: #{tpu_custom_call.1} parent=47 // pred_check_branch
          %1287 = sbr.rel (%p1285) target = $region52
        $region51: #{tpu_custom_call.1} parent=47 // pred_region
          %s1288 = sand.u32 %s138, 1
          %s1289 = scalar_lea.sflag [#allocation3], %s1288
          %s1290 = sand.u32 %s138, 1
          %s1291 = smul.addr %s1290, 8
          %s1292 = scalar_lea.vmem [#allocation2], %s1291
          %1293 = dma.done %s1289, 128
        $region52: #{tpu_custom_call.1} parent=47 // pred_fallthru
          _
      $region48: #{tpu_custom_call.1} parent=5 // pred_fallthru
        _
    $region6: #{tpu_custom_call.1} parent=1 // loop_footer
      %s18 = sadd.s32 1, %s14
    $region7: #{tpu_custom_call.1} parent=1 // loop_footer_branch
      %13 = sbr.rel target = $region3
    $region8: #{tpu_custom_call.1} parent=1 // loop_exit
      _
    %1294 = vsyncpa [#allocation3], 1
    %s1295 = scalar_lea.sflag [#allocation3], 1
    %1296 = vsyncpa %s1295, 1

</llo_original>
